<compile_context>
chip_gen: v7x
topology: tpu7x:2x2x1
jax: 0.10.0
libtpu: 0.0.40
codegen_flags: <defaults>
</compile_context>

<pallas_src>
import functools

import jax
import jax.numpy as jnp
from jax.experimental import pallas as pl
from jax.experimental.pallas import tpu as pltpu


def _round_up(n, m):
    return ((n + m - 1) // m) * m


def target_mlp_kernel(x_ref, g_ref, w1_ref, b1_ref, w2_ref, b2_ref, o_ref,
                      *, compute_dtype):
    # fc1 on the MXU: cast operands in-register (kernel is DMA-bound, so a
    # wrapper-side cast would just add an extra HBM pass), fp32 accumulation.
    h = jnp.dot(x_ref[...].astype(compute_dtype),
                w1_ref[...].astype(compute_dtype),
                preferred_element_type=jnp.float32)
    # Elementwise path in fp32: bias add, relu, gating.
    h = h + b1_ref[...].astype(jnp.float32)          # [Bt, H] + [1, H]
    h = jnp.maximum(h, 0.0)
    h = h * g_ref[...].astype(jnp.float32)           # gate (detached in torch)
    # fc2 on the MXU.
    y = jnp.dot(h.astype(compute_dtype),
                w2_ref[...].astype(compute_dtype),
                preferred_element_type=jnp.float32)
    y = y + b2_ref[...].astype(jnp.float32)          # [Bt, Do] + [1, Do]
    o_ref[...] = y.astype(o_ref.dtype)


def target_forward(x, w1, b1, gating_action, w2, b2,
                   *, block_b=2048, compute_dtype=jnp.bfloat16):
    """x: [B, D_in]; w1: [D_in, H]; b1: [1, H]; gating_action: [B, H];
    w2: [H, D_out]; b2: [1, D_out]  ->  [B, D_out] in x.dtype.

    Inputs are consumed in their native dtypes (pass bf16 gating/x if the
    producer already has them — that directly halves the dominant HBM streams).
    """
    B, D_in = x.shape
    H = w1.shape[1]
    D_out = w2.shape[1]
    out_dtype = x.dtype

    # Batch tile: multiple of 8 (sublane), as large as the batch allows, but
    # keep >=2 grid steps when possible so the "parallel" axis can shard
    # across both TensorCores on v7x (v5e/v6e are single-TC, unaffected).
    block_b = max(8, _round_up(min(int(block_b), B), 8))
    if pl.cdiv(B, block_b) < 2 and B > 8:
        block_b = max(8, _round_up(pl.cdiv(B, 2), 8))
    grid = (pl.cdiv(B, block_b),)   # ragged last block is fine: rows are
                                    # independent and OOB rows are never stored.

    flops = 2 * B * (D_in * H + H * D_out)
    bytes_accessed = (
        B * D_in * jnp.dtype(x.dtype).itemsize
        + B * H * jnp.dtype(gating_action.dtype).itemsize
        + B * D_out * jnp.dtype(out_dtype).itemsize
        + (D_in * H + H) * jnp.dtype(w1.dtype).itemsize
        + (H * D_out + D_out) * jnp.dtype(w2.dtype).itemsize)

    kernel = functools.partial(target_mlp_kernel, compute_dtype=compute_dtype)

    out = pl.pallas_call(
        kernel,
        out_shape=jax.ShapeDtypeStruct((B, D_out), out_dtype),
        grid_spec=pl.GridSpec(
            grid=grid,
            in_specs=[
                # Activation streams: advance with the batch grid index.
                pl.BlockSpec((block_b, D_in), lambda i: (i, 0)),   # x
                pl.BlockSpec((block_b, H), lambda i: (i, 0)),      # gating
                # Parameters: constant block -> VMEM-resident across steps.
                pl.BlockSpec((D_in, H), lambda i: (0, 0)),         # w1
                pl.BlockSpec((1, H), lambda i: (0, 0)),            # b1
                pl.BlockSpec((H, D_out), lambda i: (0, 0)),        # w2
                pl.BlockSpec((1, D_out), lambda i: (0, 0)),        # b2
            ],
            out_specs=pl.BlockSpec((block_b, D_out), lambda i: (i, 0)),
        ),
        compiler_params=pltpu.CompilerParams(
            dimension_semantics=("parallel",)),
        cost_estimate=pl.CostEstimate(
            flops=flops, transcendentals=0, bytes_accessed=bytes_accessed),
    )(x, gating_action, w1, b1, w2, b2)

    return out


def _reference(x, w1, b1, gating_action, w2, b2, compute_dtype=jnp.bfloat16):
    """Plain-JAX reference mirroring the kernel's dtype choices."""
    h = jnp.dot(x.astype(compute_dtype), w1.astype(compute_dtype),
                preferred_element_type=jnp.float32)
    h = jnp.maximum(h + b1.astype(jnp.float32), 0.0)
    h = h * gating_action.astype(jnp.float32)
    y = jnp.dot(h.astype(compute_dtype), w2.astype(compute_dtype),
                preferred_element_type=jnp.float32)
    return (y + b2.astype(jnp.float32)).astype(x.dtype)


if __name__ == "__main__":
    # Module-consistent feature sizes; batch large enough to exercise >=2 grid steps.
    B, D_in, H, D_out = 512, 16, 32, 8

    key = jax.random.PRNGKey(0)
    kx, kg, kw1, kb1, kw2, kb2 = jax.random.split(key, 6)

    x = jax.random.normal(kx, (B, D_in), dtype=jnp.float32)
    gating_action = jax.random.uniform(kg, (B, H), dtype=jnp.float32)

    # PyTorch stores W as [out, in]; we keep the pre-transposed [in, out] layout.
    w1 = jax.random.normal(kw1, (D_in, H), dtype=jnp.float32) * 0.1
    b1 = jax.random.normal(kb1, (1, H), dtype=jnp.float32) * 0.1
    w2 = jax.random.normal(kw2, (H, D_out), dtype=jnp.float32) * 0.1
    b2 = jax.random.normal(kb2, (1, D_out), dtype=jnp.float32) * 0.1

    y = target_forward(x, w1, b1, gating_action, w2, b2)
    jax.block_until_ready(y)
    assert y.shape == (B, D_out)
    assert y.dtype == x.dtype

    # Exact-path reference (same bf16 casts, fp32 accumulation).
    y_ref = _reference(x, w1, b1, gating_action, w2, b2)
    assert jnp.allclose(y, y_ref, atol=1e-3, rtol=1e-3)

    # Coarse sanity check against the full fp32 math of the torch forward.
    h32 = jnp.maximum(x @ w1 + b1, 0.0) * gating_action
    y32 = h32 @ w2 + b2
    assert jnp.allclose(y, y32, atol=1e-1, rtol=1e-1)

    # Exercise the ragged-grid path (batch not a multiple of the tile / of 8),
    # with no wrapper-side pad or slice.
    y_small = target_forward(x[:10], w1, b1, gating_action[:10], w2, b2)
    jax.block_until_ready(y_small)
    assert y_small.shape == (10, D_out)
    assert jnp.allclose(y_small, y_ref[:10], atol=1e-3, rtol=1e-3)

    # bf16 inputs path (what a bf16 producer would feed): halves the dominant
    # gating/x HBM streams; kernel upcasts in-register.
    y_bf16 = target_forward(x.astype(jnp.bfloat16), w1, b1,
                            gating_action.astype(jnp.bfloat16), w2, b2)
    jax.block_until_ready(y_bf16)
    assert y_bf16.dtype == jnp.bfloat16
    assert jnp.allclose(y_bf16.astype(jnp.float32), y32, atol=2e-1, rtol=2e-1)

    print("KERNEL_OK")
</pallas_src>

<mosaic_0001>
module attributes {stable_mosaic.version = 11 : i64} {
  func.func @target_mlp_kernel(%arg0: i32, %arg1: memref<256x16xf32, #tpu.memory_space<vmem>>, %arg2: memref<256x32xf32, #tpu.memory_space<vmem>>, %arg3: memref<16x32xf32, #tpu.memory_space<vmem>>, %arg4: memref<1x32xf32, #tpu.memory_space<vmem>>, %arg5: memref<32x8xf32, #tpu.memory_space<vmem>>, %arg6: memref<1x8xf32, #tpu.memory_space<vmem>>, %arg7: memref<256x8xf32, #tpu.memory_space<vmem>>) attributes {dimension_semantics = [#tpu.dimension_semantics<parallel>], iteration_bounds = array<i64: 2>, scalar_prefetch = 0 : i64, scratch_operands = 0 : i64, tpu.core_type = #tpu.core_type<tc>, window_params = [{transform_indices = @transform_0, window_bounds = array<i64: 256, 16>}, {transform_indices = @transform_1, window_bounds = array<i64: 256, 32>}, {pipeline_mode = #tpu.pipeline_mode<synchronous>, transform_indices = @transform_2, window_bounds = array<i64: 16, 32>}, {pipeline_mode = #tpu.pipeline_mode<synchronous>, transform_indices = @transform_3, window_bounds = array<i64: 1, 32>}, {pipeline_mode = #tpu.pipeline_mode<synchronous>, transform_indices = @transform_4, window_bounds = array<i64: 32, 8>}, {pipeline_mode = #tpu.pipeline_mode<synchronous>, transform_indices = @transform_5, window_bounds = array<i64: 1, 8>}, {transform_indices = @transform_6, window_bounds = array<i64: 256, 8>}]} {
    %c0 = arith.constant 0 : index
    %c0_0 = arith.constant 0 : index
    %0 = vector.load %arg1[%c0, %c0_0] : memref<256x16xf32, #tpu.memory_space<vmem>>, vector<256x16xf32>
    %1 = arith.truncf %0 : vector<256x16xf32> to vector<256x16xbf16>
    %c0_1 = arith.constant 0 : index
    %c0_2 = arith.constant 0 : index
    %2 = vector.load %arg3[%c0_1, %c0_2] : memref<16x32xf32, #tpu.memory_space<vmem>>, vector<16x32xf32>
    %3 = arith.truncf %2 : vector<16x32xf32> to vector<16x32xbf16>
    %cst = arith.constant dense<0.000000e+00> : vector<256x32xf32>
    %4 = tpu.matmul %1, %3, %cst {dimension_numbers = #tpu.dot_dimension_numbers<[1], [0], [0], [1], [0, 0, 1, 1], [], []>} : vector<256x16xbf16>, vector<16x32xbf16>, vector<256x32xf32> -> vector<256x32xf32>
    %c0_3 = arith.constant 0 : index
    %c0_4 = arith.constant 0 : index
    %5 = vector.load %arg4[%c0_3, %c0_4] : memref<1x32xf32, #tpu.memory_space<vmem>>, vector<1x32xf32>
    %6 = vector.broadcast %5 : vector<1x32xf32> to vector<256x32xf32>
    %7 = arith.addf %4, %6 : vector<256x32xf32>
    %cst_5 = arith.constant 0.000000e+00 : f32
    %8 = vector.broadcast %cst_5 : f32 to vector<256x32xf32>
    %9 = arith.maximumf %7, %8 : vector<256x32xf32>
    %c0_6 = arith.constant 0 : index
    %c0_7 = arith.constant 0 : index
    %10 = vector.load %arg2[%c0_6, %c0_7] : memref<256x32xf32, #tpu.memory_space<vmem>>, vector<256x32xf32>
    %11 = arith.mulf %9, %10 : vector<256x32xf32>
    %12 = arith.truncf %11 : vector<256x32xf32> to vector<256x32xbf16>
    %c0_8 = arith.constant 0 : index
    %c0_9 = arith.constant 0 : index
    %13 = vector.load %arg5[%c0_8, %c0_9] : memref<32x8xf32, #tpu.memory_space<vmem>>, vector<32x8xf32>
    %14 = arith.truncf %13 : vector<32x8xf32> to vector<32x8xbf16>
    %cst_10 = arith.constant dense<0.000000e+00> : vector<256x8xf32>
    %15 = tpu.matmul %12, %14, %cst_10 {dimension_numbers = #tpu.dot_dimension_numbers<[1], [0], [0], [1], [0, 0, 1, 1], [], []>} : vector<256x32xbf16>, vector<32x8xbf16>, vector<256x8xf32> -> vector<256x8xf32>
    %c0_11 = arith.constant 0 : index
    %c0_12 = arith.constant 0 : index
    %16 = vector.load %arg6[%c0_11, %c0_12] : memref<1x8xf32, #tpu.memory_space<vmem>>, vector<1x8xf32>
    %17 = vector.broadcast %16 : vector<1x8xf32> to vector<256x8xf32>
    %18 = arith.addf %15, %17 : vector<256x8xf32>
    %c0_13 = arith.constant 0 : index
    %c0_14 = arith.constant 0 : index
    %19 = vector.load %arg7[%c0_13, %c0_14] : memref<256x8xf32, #tpu.memory_space<vmem>>, vector<256x8xf32>
    tpu.vector_store %arg7[%c0_13, %c0_14], %18 {strides = array<i32>} : memref<256x8xf32, #tpu.memory_space<vmem>>, vector<256x8xf32>,
    return
  }
  func.func @transform_0(%arg0: i32) -> (i32, i32) {
    %c0_i32 = arith.constant 0 : i32
    %c0_i32_0 = arith.constant 0 : i32
    return %arg0, %c0_i32 : i32, i32
  }
  func.func @transform_1(%arg0: i32) -> (i32, i32) {
    %c0_i32 = arith.constant 0 : i32
    %c0_i32_0 = arith.constant 0 : i32
    return %arg0, %c0_i32 : i32, i32
  }
  func.func @transform_2(%arg0: i32) -> (i32, i32) {
    %c0_i32 = arith.constant 0 : i32
    %c0_i32_0 = arith.constant 0 : i32
    %c0_i32_1 = arith.constant 0 : i32
    return %c0_i32, %c0_i32_0 : i32, i32
  }
  func.func @transform_3(%arg0: i32) -> (i32, i32) {
    %c0_i32 = arith.constant 0 : i32
    %c0_i32_0 = arith.constant 0 : i32
    %c0_i32_1 = arith.constant 0 : i32
    return %c0_i32, %c0_i32_0 : i32, i32
  }
  func.func @transform_4(%arg0: i32) -> (i32, i32) {
    %c0_i32 = arith.constant 0 : i32
    %c0_i32_0 = arith.constant 0 : i32
    %c0_i32_1 = arith.constant 0 : i32
    return %c0_i32, %c0_i32_0 : i32, i32
  }
  func.func @transform_5(%arg0: i32) -> (i32, i32) {
    %c0_i32 = arith.constant 0 : i32
    %c0_i32_0 = arith.constant 0 : i32
    %c0_i32_1 = arith.constant 0 : i32
    return %c0_i32, %c0_i32_0 : i32, i32
  }
  func.func @transform_6(%arg0: i32) -> (i32, i32) {
    %c0_i32 = arith.constant 0 : i32
    %c0_i32_0 = arith.constant 0 : i32
    return %arg0, %c0_i32 : i32, i32
  }
}

</mosaic_0001>

<llo_original>
// kernel: tpu_custom_call.1
$region0: #{tpu_custom_call.1}
  #allocation0 [shape = 'u32[]', space=smem, size = 0x4, offset = 0x4, fixed_abs, tag = 'smem constant byte address 0x4 - core index']
  #allocation1 [shape = 'u32[144,128]{1,0:T(1,128)}', space=vmem, size = 0x12000, scoped, tag = 'internal scratch']
  %s0 = inlined_call_operand.vmem [shape: f32[512,16], index: 0, kind: input, shape index: {}]
  %s1 = inlined_call_operand.vmem [shape: f32[512,32], index: 1, kind: input, shape index: {}]
  %s2 = inlined_call_operand.vmem [shape: f32[16,32], index: 2, kind: input, shape index: {}]
  %s3 = inlined_call_operand.vmem [shape: f32[1,32], index: 3, kind: input, shape index: {}]
  %s4 = inlined_call_operand.vmem [shape: f32[32,8], index: 4, kind: input, shape index: {}]
  %s5 = inlined_call_operand.vmem [shape: f32[1,8], index: 5, kind: input, shape index: {}]
  %s6 = inlined_call_operand.vmem [shape: f32[512,8], index: 6, kind: output, shape index: {}]
  %s7 = sld [smem:[#allocation0]]
  $region57: #{tpu_custom_call.1} parent=0
    _
  %s9 = ssub.s32 1, %s7
  %s10 = scalar_select 0, %s9, %s7
  loop: start=0, step=1, limit=4
  $region2: #{tpu_custom_call.1} parent=0 // loop_pre_header
    _
  $region3: #{tpu_custom_call.1} parent=0 // loop_header
    %s12 = sphi 0, %s16
    %p13 = scmp.ge.s32.totalorder %s12, 4
    %s22 = sphi 0, %s24
    %s25 = sphi 0, %s22
    %s26 = sphi 0, %s25
    %s42 = sphi 0, %s26
    %s48 = sphi 0, %s50
    %s51 = sphi 0, %s48
    %s52 = sphi 0, %s51
    %s68 = sphi 0, %s52
    %s72 = sphi 0, %s72
    %s74 = sphi 0, %s72
    %s75 = sphi 0, %s74
    %s89 = sphi 0, %s75
    %s93 = sphi 0, %s93
    %s95 = sphi 0, %s93
    %s96 = sphi 0, %s95
    %s110 = sphi 0, %s96
    %s114 = sphi 0, %s114
    %s116 = sphi 0, %s114
    %s117 = sphi 0, %s116
    %s131 = sphi 0, %s117
    %s135 = sphi 0, %s135
    %s137 = sphi 0, %s135
    %s138 = sphi 0, %s137
    %s152 = sphi 0, %s138
    %s158 = sphi 0, %s160
    %s161 = sphi 0, %s158
    %s162 = sphi 0, %s161
    %s178 = sphi 0, %s162
  $region4: #{tpu_custom_call.1} parent=0 // loop_header_branch
    %15 = sbr.rel (%p13) target = $region8
  $region5: #{tpu_custom_call.1} parent=0 // loop_body
    %s17 = ssub.s32 %s12, 1
    %s18 = ssub.s32 %s12, 2
    %s19 = sadd.s32 %s12, 1
    %s20 = ssub.s32 %s12, %s19
    %p21 = scmp.eq.s32.totalorder %s20, 0
    %s23 = sadd.s32 %s22, 1
    %s24 = scalar_select %p21, %s22, %s23
    %p27 = pneg %p21
    %p28 = scmp.eq.s32.totalorder %s12, 1
    %p29 = por %p27, %p28
    %p30 = scmp.ne.s32.totalorder %s22, %s25
    %p31 = scmp.eq.s32.totalorder %s12, 0
    %p32 = por %p30, %p31
    %p33 = scmp.ne.s32.totalorder %s22, %s25
    %p34 = scmp.eq.s32.totalorder %s17, 1
    %p35 = por %p33, %p34
    %p36 = scmp.ne.s32.totalorder %s25, %s26
    %p37 = scmp.eq.s32.totalorder %s17, 0
    %p38 = por %p36, %p37
    %p39 = scmp.ne.s32.totalorder %s25, %s26
    %p40 = scmp.eq.s32.totalorder %s18, 1
    %p41 = por %p39, %p40
    %p43 = scmp.ne.s32.totalorder %s26, %s42
    %p44 = scmp.eq.s32.totalorder %s18, 0
    %p45 = por %p43, %p44
    %s46 = ssub.s32 %s12, %s19
    %p47 = scmp.eq.s32.totalorder %s46, 0
    %s49 = sadd.s32 %s48, 1
    %s50 = scalar_select %p47, %s48, %s49
    %p53 = pneg %p47
    %p54 = scmp.eq.s32.totalorder %s12, 1
    %p55 = por %p53, %p54
    %p56 = scmp.ne.s32.totalorder %s48, %s51
    %p57 = scmp.eq.s32.totalorder %s12, 0
    %p58 = por %p56, %p57
    %p59 = scmp.ne.s32.totalorder %s48, %s51
    %p60 = scmp.eq.s32.totalorder %s17, 1
    %p61 = por %p59, %p60
    %p62 = scmp.ne.s32.totalorder %s51, %s52
    %p63 = scmp.eq.s32.totalorder %s17, 0
    %p64 = por %p62, %p63
    %p65 = scmp.ne.s32.totalorder %s51, %s52
    %p66 = scmp.eq.s32.totalorder %s18, 1
    %p67 = por %p65, %p66
    %p69 = scmp.ne.s32.totalorder %s52, %s68
    %p70 = scmp.eq.s32.totalorder %s18, 0
    %p71 = por %p69, %p70
    %s73 = sadd.s32 %s72, 1
    %p76 = scmp.eq.s32.totalorder %s12, 1
    %p77 = scmp.ne.s32.totalorder %s72, %s74
    %p78 = scmp.eq.s32.totalorder %s12, 0
    %p79 = por %p77, %p78
    %p80 = scmp.ne.s32.totalorder %s72, %s74
    %p81 = scmp.eq.s32.totalorder %s17, 1
    %p82 = por %p80, %p81
    %p83 = scmp.ne.s32.totalorder %s74, %s75
    %p84 = scmp.eq.s32.totalorder %s17, 0
    %p85 = por %p83, %p84
    %p86 = scmp.ne.s32.totalorder %s74, %s75
    %p87 = scmp.eq.s32.totalorder %s18, 1
    %p88 = por %p86, %p87
    %p90 = scmp.ne.s32.totalorder %s75, %s89
    %p91 = scmp.eq.s32.totalorder %s18, 0
    %p92 = por %p90, %p91
    %s94 = sadd.s32 %s93, 1
    %p97 = scmp.eq.s32.totalorder %s12, 1
    %p98 = scmp.ne.s32.totalorder %s93, %s95
    %p99 = scmp.eq.s32.totalorder %s12, 0
    %p100 = por %p98, %p99
    %p101 = scmp.ne.s32.totalorder %s93, %s95
    %p102 = scmp.eq.s32.totalorder %s17, 1
    %p103 = por %p101, %p102
    %p104 = scmp.ne.s32.totalorder %s95, %s96
    %p105 = scmp.eq.s32.totalorder %s17, 0
    %p106 = por %p104, %p105
    %p107 = scmp.ne.s32.totalorder %s95, %s96
    %p108 = scmp.eq.s32.totalorder %s18, 1
    %p109 = por %p107, %p108
    %p111 = scmp.ne.s32.totalorder %s96, %s110
    %p112 = scmp.eq.s32.totalorder %s18, 0
    %p113 = por %p111, %p112
    %s115 = sadd.s32 %s114, 1
    %p118 = scmp.eq.s32.totalorder %s12, 1
    %p119 = scmp.ne.s32.totalorder %s114, %s116
    %p120 = scmp.eq.s32.totalorder %s12, 0
    %p121 = por %p119, %p120
    %p122 = scmp.ne.s32.totalorder %s114, %s116
    %p123 = scmp.eq.s32.totalorder %s17, 1
    %p124 = por %p122, %p123
    %p125 = scmp.ne.s32.totalorder %s116, %s117
    %p126 = scmp.eq.s32.totalorder %s17, 0
    %p127 = por %p125, %p126
    %p128 = scmp.ne.s32.totalorder %s116, %s117
    %p129 = scmp.eq.s32.totalorder %s18, 1
    %p130 = por %p128, %p129
    %p132 = scmp.ne.s32.totalorder %s117, %s131
    %p133 = scmp.eq.s32.totalorder %s18, 0
    %p134 = por %p132, %p133
    %s136 = sadd.s32 %s135, 1
    %p139 = scmp.eq.s32.totalorder %s12, 1
    %p140 = scmp.ne.s32.totalorder %s135, %s137
    %p141 = scmp.eq.s32.totalorder %s12, 0
    %p142 = por %p140, %p141
    %p143 = scmp.ne.s32.totalorder %s135, %s137
    %p144 = scmp.eq.s32.totalorder %s17, 1
    %p145 = por %p143, %p144
    %p146 = scmp.ne.s32.totalorder %s137, %s138
    %p147 = scmp.eq.s32.totalorder %s17, 0
    %p148 = por %p146, %p147
    %p149 = scmp.ne.s32.totalorder %s137, %s138
    %p150 = scmp.eq.s32.totalorder %s18, 1
    %p151 = por %p149, %p150
    %p153 = scmp.ne.s32.totalorder %s138, %s152
    %p154 = scmp.eq.s32.totalorder %s18, 0
    %p155 = por %p153, %p154
    %s156 = ssub.s32 %s12, %s19
    %p157 = scmp.eq.s32.totalorder %s156, 0
    %s159 = sadd.s32 %s158, 1
    %s160 = scalar_select %p157, %s158, %s159
    %p163 = pneg %p157
    %p164 = scmp.eq.s32.totalorder %s12, 1
    %p165 = por %p163, %p164
    %p166 = scmp.ne.s32.totalorder %s158, %s161
    %p167 = scmp.eq.s32.totalorder %s12, 0
    %p168 = por %p166, %p167
    %p169 = scmp.ne.s32.totalorder %s158, %s161
    %p170 = scmp.eq.s32.totalorder %s17, 1
    %p171 = por %p169, %p170
    %p172 = scmp.ne.s32.totalorder %s161, %s162
    %p173 = scmp.eq.s32.totalorder %s17, 0
    %p174 = por %p172, %p173
    %p175 = scmp.ne.s32.totalorder %s161, %s162
    %p176 = scmp.eq.s32.totalorder %s18, 1
    %p177 = por %p175, %p176
    %p179 = scmp.ne.s32.totalorder %s162, %s178
    %p180 = scmp.eq.s32.totalorder %s18, 0
    %p181 = por %p179, %p180
    %p182 = scmp.le.s32.totalorder 1, %s12
    %p183 = scmp.lt.s32.totalorder %s12, 3
    %p184 = pnand %p182, %p183
    %p185 = pneg %p184
    // Predicated region
    $region9: #{tpu_custom_call.1} parent=5 // pred_check
      _
    $region10: #{tpu_custom_call.1} parent=5 // pred_check_branch
      %187 = sbr.rel (%p184) target = $region12
    $region11: #{tpu_custom_call.1} parent=5 // pred_region
      %s188 = ssub.s32 %s12, 1
      // Predicated region
      $region13: #{tpu_custom_call.1} parent=11 // pred_check
        %p189 = pneg %p85
      $region14: #{tpu_custom_call.1} parent=11 // pred_check_branch
        %191 = sbr.rel (%p189) target = $region16
      $region15: #{tpu_custom_call.1} parent=11 // pred_region
        _
      $region16: #{tpu_custom_call.1} parent=11 // pred_fallthru
        _
      // Predicated region
      $region17: #{tpu_custom_call.1} parent=11 // pred_check
        %p192 = pneg %p106
      $region18: #{tpu_custom_call.1} parent=11 // pred_check_branch
        %194 = sbr.rel (%p192) target = $region20
      $region19: #{tpu_custom_call.1} parent=11 // pred_region
        _
      $region20: #{tpu_custom_call.1} parent=11 // pred_fallthru
        _
      // Predicated region
      $region21: #{tpu_custom_call.1} parent=11 // pred_check
        %p195 = pneg %p127
      $region22: #{tpu_custom_call.1} parent=11 // pred_check_branch
        %197 = sbr.rel (%p195) target = $region24
      $region23: #{tpu_custom_call.1} parent=11 // pred_region
        _
      $region24: #{tpu_custom_call.1} parent=11 // pred_fallthru
        _
      // Predicated region
      $region25: #{tpu_custom_call.1} parent=11 // pred_check
        %p198 = pneg %p148
      $region26: #{tpu_custom_call.1} parent=11 // pred_check_branch
        %200 = sbr.rel (%p198) target = $region28
      $region27: #{tpu_custom_call.1} parent=11 // pred_region
        _
      $region28: #{tpu_custom_call.1} parent=11 // pred_fallthru
        _
    $region12: #{tpu_custom_call.1} parent=5 // pred_fallthru
      _
    %p201 = scmp.lt.s32.totalorder %s12, 2
    // Predicated region
    $region29: #{tpu_custom_call.1} parent=5 // pred_check
      %p202 = pneg %p201
    $region30: #{tpu_custom_call.1} parent=5 // pred_check_branch
      %204 = sbr.rel (%p202) target = $region32
    $region31: #{tpu_custom_call.1} parent=5 // pred_region
      // Predicated region
      $region33: #{tpu_custom_call.1} parent=31 // pred_check
        %p205 = pneg %p32
      $region34: #{tpu_custom_call.1} parent=31 // pred_check_branch
        %207 = sbr.rel (%p205) target = $region36
      $region35: #{tpu_custom_call.1} parent=31 // pred_region
        %s208 = smul.u32 32, %s12
        %p209 = scmp.lt.s32.totalorder %s208, 63
        %s210 = scalar_select %p209, %s208, 63
        %s211 = smul.addr %s210, 8
        %s212 = scalar_lea.vmem %s0, %s211
        %s213 = smul.u32 32, %s12
      $region36: #{tpu_custom_call.1} parent=31 // pred_fallthru
        _
      // Predicated region
      $region37: #{tpu_custom_call.1} parent=31 // pred_check
        %p214 = pneg %p58
      $region38: #{tpu_custom_call.1} parent=31 // pred_check_branch
        %216 = sbr.rel (%p214) target = $region40
      $region39: #{tpu_custom_call.1} parent=31 // pred_region
        %s217 = smul.u32 32, %s12
        %p218 = scmp.lt.s32.totalorder %s217, 63
        %s219 = scalar_select %p218, %s217, 63
        %s220 = smul.addr %s219, 8
        %s221 = scalar_lea.vmem %s1, %s220
        %s222 = smul.u32 32, %s12
      $region40: #{tpu_custom_call.1} parent=31 // pred_fallthru
        _
    $region32: #{tpu_custom_call.1} parent=5 // pred_fallthru
      _
    %p223 = scmp.le.s32.totalorder 1, %s12
    %p224 = scmp.lt.s32.totalorder %s12, 3
    %p225 = pnand %p223, %p224
    %p226 = pneg %p225
    // Predicated region
    $region41: #{tpu_custom_call.1} parent=5 // pred_check
      _
    $region42: #{tpu_custom_call.1} parent=5 // pred_check_branch
      %228 = sbr.rel (%p225) target = $region44
    $region43: #{tpu_custom_call.1} parent=5 // pred_region
      %s229 = ssub.s32 %s12, 1
      %s230 = smul.u32 32, %s17
      %p231 = scmp.lt.s32.totalorder %s230, 63
      %s232 = scalar_select %p231, %s230, 63
      %s233 = smul.addr %s232, 8
      %s234 = scalar_lea.vmem %s0, %s233
      %p235 = pneg %p38
      %p236 = pneg %p35
      %s237 = smul.u32 32, %s17
      %p238 = scmp.lt.s32.totalorder %s237, 63
      %s239 = scalar_select %p238, %s237, 63
      %s240 = smul.addr %s239, 8
      %s241 = scalar_lea.vmem %s1, %s240
      %p242 = pneg %p64
      %p243 = pneg %p61
      %p244 = pneg %p85
      %p245 = pneg %p82
      %p246 = pneg %p106
      %p247 = pneg %p103
      %p248 = pneg %p127
      %p249 = pneg %p124
      %p250 = pneg %p148
      %p251 = pneg %p145
      %p252 = pneg %p174
      %p253 = pneg %p171
      %s254 = smul.u32 32, %s17
      %p255 = scmp.lt.s32.totalorder %s254, 63
      %s256 = scalar_select %p255, %s254, 63
      %s257 = smul.addr %s256, 8
      %s258 = scalar_lea.vmem %s6, %s257
      %s259 = smul.u32 32, %s17
      %p260 = scmp.lt.s32.totalorder %s259, 63
      %s261 = scalar_select %p260, %s259, 63
      %s262 = smul.addr %s261, 8
      %s263 = scalar_lea.vmem %s0, %s262
      %s264 = smul.u32 32, %s17
      %s265 = smul.u32 32, %s17
      %p266 = scmp.lt.s32.totalorder %s265, 63
      %s267 = scalar_select %p266, %s265, 63
      %s268 = smul.addr %s267, 8
      %s269 = scalar_lea.vmem %s1, %s268
      %s270 = smul.u32 32, %s17
      %s271 = smul.u32 32, %s17
      %p272 = scmp.lt.s32.totalorder %s271, 63
      %s273 = scalar_select %p272, %s271, 63
      %s274 = smul.addr %s273, 8
      %s275 = scalar_lea.vmem %s6, %s274
      %s276 = smul.u32 32, %s17
      %v278 = vld [vmem:[%s263] sm:$0xff]
      %v279 = vld [vmem:[%s263 + $0x8] sm:$0xff]
      %v280 = vld [vmem:[%s263 + $0x10] sm:$0xff]
      %v281 = vld [vmem:[%s263 + $0x18] sm:$0xff]
      %v282 = vld [vmem:[%s263 + $0x20] sm:$0xff]
      %v283 = vld [vmem:[%s263 + $0x28] sm:$0xff]
      %v284 = vld [vmem:[%s263 + $0x30] sm:$0xff]
      %v285 = vld [vmem:[%s263 + $0x38] sm:$0xff]
      %v286 = vld [vmem:[%s263 + $0x40] sm:$0xff]
      %v287 = vld [vmem:[%s263 + $0x48] sm:$0xff]
      %v288 = vld [vmem:[%s263 + $0x50] sm:$0xff]
      %v289 = vld [vmem:[%s263 + $0x58] sm:$0xff]
      %v290 = vld [vmem:[%s263 + $0x60] sm:$0xff]
      %v291 = vld [vmem:[%s263 + $0x68] sm:$0xff]
      %v292 = vld [vmem:[%s263 + $0x70] sm:$0xff]
      %v293 = vld [vmem:[%s263 + $0x78] sm:$0xff]
      %v294 = vld [vmem:[%s263 + $0x80] sm:$0xff]
      %v295 = vld [vmem:[%s263 + $0x88] sm:$0xff]
      %v296 = vld [vmem:[%s263 + $0x90] sm:$0xff]
      %v297 = vld [vmem:[%s263 + $0x98] sm:$0xff]
      %v298 = vld [vmem:[%s263 + $0xa0] sm:$0xff]
      %v299 = vld [vmem:[%s263 + $0xa8] sm:$0xff]
      %v300 = vld [vmem:[%s263 + $0xb0] sm:$0xff]
      %v301 = vld [vmem:[%s263 + $0xb8] sm:$0xff]
      %v302 = vld [vmem:[%s263 + $0xc0] sm:$0xff]
      %v303 = vld [vmem:[%s263 + $0xc8] sm:$0xff]
      %v304 = vld [vmem:[%s263 + $0xd0] sm:$0xff]
      %v305 = vld [vmem:[%s263 + $0xd8] sm:$0xff]
      %v306 = vld [vmem:[%s263 + $0xe0] sm:$0xff]
      %v307 = vld [vmem:[%s263 + $0xe8] sm:$0xff]
      %v308 = vld [vmem:[%s263 + $0xf0] sm:$0xff]
      %v309 = vld [vmem:[%s263 + $0xf8] sm:$0xff]
      %v310 = vpack.c.bf16 %v279, %v278
      %v311 = vpack.c.bf16 %v281, %v280
      %v312 = vpack.c.bf16 %v283, %v282
      %v313 = vpack.c.bf16 %v285, %v284
      %v314 = vpack.c.bf16 %v287, %v286
      %v315 = vpack.c.bf16 %v289, %v288
      %v316 = vpack.c.bf16 %v291, %v290
      %v317 = vpack.c.bf16 %v293, %v292
      %v318 = vpack.c.bf16 %v295, %v294
      %v319 = vpack.c.bf16 %v297, %v296
      %v320 = vpack.c.bf16 %v299, %v298
      %v321 = vpack.c.bf16 %v301, %v300
      %v322 = vpack.c.bf16 %v303, %v302
      %v323 = vpack.c.bf16 %v305, %v304
      %v324 = vpack.c.bf16 %v307, %v306
      %v325 = vpack.c.bf16 %v309, %v308
      %v326 = vld [vmem:[%s2] sm:$0xff]
      %v327 = vld [vmem:[%s2 + $0x8] sm:$0xff]
      %v328 = vpack.c.bf16 %v327, %v326
      %v329 = vld [vmem:[%s3] sm:$0x1]
      %v331 = vlaneseq
      %v332 = vshrl.u32 %v331, 7
      %v333 = vsub.s32 0, %v332
      %v334 = vrot.slane %v329, %v333
      %vm336 = vcmask 130048
      %v338 = vsel %vm336, %v310, 0
      %v341 = vsel %vm336, %v311, 0
      %v344 = vsel %vm336, %v312, 0
      %v347 = vsel %vm336, %v313, 0
      %v350 = vsel %vm336, %v314, 0
      %v353 = vsel %vm336, %v315, 0
      %v356 = vsel %vm336, %v316, 0
      %v359 = vsel %vm336, %v317, 0
      %v362 = vsel %vm336, %v318, 0
      %v365 = vsel %vm336, %v319, 0
      %v368 = vsel %vm336, %v320, 0
      %v371 = vsel %vm336, %v321, 0
      %v374 = vsel %vm336, %v322, 0
      %v377 = vsel %vm336, %v323, 0
      %v380 = vsel %vm336, %v324, 0
      %v383 = vsel %vm336, %v325, 0
      %385 = vmatprep.subr.bf16.mxu0 0
      %386 = vmatpush1.bf16.msra.mxu0 %v328
      %387 = vmatprep.subr.bf16.mxu0 0
      %388 = vmatpush1.bf16.msra.mxu0 0
      %389 = vmatprep.subr.bf16.mxu0 0
      %390 = vmatpush1.bf16.msra.mxu0 0
      %391 = vmatprep.subr.bf16.mxu0 0
      %392 = vmatpush1.bf16.msra.mxu0 0
      %393 = vmatprep.subr.bf16.mxu0 0
      %394 = vmatpush1.bf16.msra.mxu0 0
      %395 = vmatprep.subr.bf16.mxu0 0
      %396 = vmatpush1.bf16.msra.mxu0 0
      %397 = vmatprep.subr.bf16.mxu0 0
      %398 = vmatpush1.bf16.msra.mxu0 0
      %399 = vmatprep.subr.bf16.mxu0 0
      %400 = vmatpush1.bf16.msra.mxu0 0
      %401 = vmatprep.subr.bf16.mxu0 0
      %402 = vmatpush1.bf16.msra.mxu0 0
      %403 = vmatprep.subr.bf16.mxu0 0
      %404 = vmatpush1.bf16.msra.mxu0 0
      %405 = vmatprep.subr.bf16.mxu0 0
      %406 = vmatpush1.bf16.msra.mxu0 0
      %407 = vmatprep.subr.bf16.mxu0 0
      %408 = vmatpush1.bf16.msra.mxu0 0
      %409 = vmatprep.subr.bf16.mxu0 0
      %410 = vmatpush1.bf16.msra.mxu0 0
      %411 = vmatprep.subr.bf16.mxu0 0
      %412 = vmatpush1.bf16.msra.mxu0 0
      %413 = vmatprep.subr.bf16.mxu0 0
      %414 = vmatpush1.bf16.msra.mxu0 0
      %415 = vmatprep.subr.bf16.mxu0 0
      %416 = vmatpush1.bf16.msra.mxu0 0
      %417 = vmatprep.mubr.bf16.mxu0 0
      %418 = vmatmul.mubr.bf16.gmra.mrb[0].mxu0 %v338
      %v419 = vpop.f32.mrb[0].mxu0
      %v420 = vadd.f32 %v334, %v419
      %v421 = vpop.f32.mrb[0].mxu0
      %v422 = vpop.f32.mrb[0].mxu0
      %v423 = vadd.f32 %v334, %v422
      %v424 = vpop.f32.mrb[0].mxu0
      %425 = vmatprep.mubr.bf16.mxu0 0
      %426 = vmatmul.mubr.bf16.gmra.mrb[0].mxu0 %v341
      %v427 = vpop.f32.mrb[0].mxu0
      %v428 = vadd.f32 %v334, %v427
      %v429 = vpop.f32.mrb[0].mxu0
      %v430 = vpop.f32.mrb[0].mxu0
      %v431 = vadd.f32 %v334, %v430
      %v432 = vpop.f32.mrb[0].mxu0
      %433 = vmatprep.mubr.bf16.mxu0 0
      %434 = vmatmul.mubr.bf16.gmra.mrb[0].mxu0 %v344
      %v435 = vpop.f32.mrb[0].mxu0
      %v436 = vadd.f32 %v334, %v435
      %v437 = vpop.f32.mrb[0].mxu0
      %v438 = vpop.f32.mrb[0].mxu0
      %v439 = vadd.f32 %v334, %v438
      %v440 = vpop.f32.mrb[0].mxu0
      %441 = vmatprep.mubr.bf16.mxu0 0
      %442 = vmatmul.mubr.bf16.gmra.mrb[0].mxu0 %v347
      %v443 = vpop.f32.mrb[0].mxu0
      %v444 = vadd.f32 %v334, %v443
      %v445 = vpop.f32.mrb[0].mxu0
      %v446 = vpop.f32.mrb[0].mxu0
      %v447 = vadd.f32 %v334, %v446
      %v448 = vpop.f32.mrb[0].mxu0
      %449 = vmatprep.mubr.bf16.mxu0 0
      %450 = vmatmul.mubr.bf16.gmra.mrb[0].mxu0 %v350
      %v451 = vpop.f32.mrb[0].mxu0
      %v452 = vadd.f32 %v334, %v451
      %v453 = vpop.f32.mrb[0].mxu0
      %v454 = vpop.f32.mrb[0].mxu0
      %v455 = vadd.f32 %v334, %v454
      %v456 = vpop.f32.mrb[0].mxu0
      %457 = vmatprep.mubr.bf16.mxu0 0
      %458 = vmatmul.mubr.bf16.gmra.mrb[0].mxu0 %v353
      %v459 = vpop.f32.mrb[0].mxu0
      %v460 = vadd.f32 %v334, %v459
      %v461 = vpop.f32.mrb[0].mxu0
      %v462 = vpop.f32.mrb[0].mxu0
      %v463 = vadd.f32 %v334, %v462
      %v464 = vpop.f32.mrb[0].mxu0
      %465 = vmatprep.mubr.bf16.mxu0 0
      %466 = vmatmul.mubr.bf16.gmra.mrb[0].mxu0 %v356
      %v467 = vpop.f32.mrb[0].mxu0
      %v468 = vadd.f32 %v334, %v467
      %v469 = vpop.f32.mrb[0].mxu0
      %v470 = vpop.f32.mrb[0].mxu0
      %v471 = vadd.f32 %v334, %v470
      %v472 = vpop.f32.mrb[0].mxu0
      %473 = vmatprep.mubr.bf16.mxu0 0
      %474 = vmatmul.mubr.bf16.gmra.mrb[0].mxu0 %v359
      %v475 = vpop.f32.mrb[0].mxu0
      %v476 = vadd.f32 %v334, %v475
      %v477 = vpop.f32.mrb[0].mxu0
      %v478 = vpop.f32.mrb[0].mxu0
      %v479 = vadd.f32 %v334, %v478
      %v480 = vpop.f32.mrb[0].mxu0
      %481 = vmatprep.mubr.bf16.mxu0 0
      %482 = vmatmul.mubr.bf16.gmra.mrb[0].mxu0 %v362
      %v483 = vpop.f32.mrb[0].mxu0
      %v484 = vadd.f32 %v334, %v483
      %v485 = vpop.f32.mrb[0].mxu0
      %v486 = vpop.f32.mrb[0].mxu0
      %v487 = vadd.f32 %v334, %v486
      %v488 = vpop.f32.mrb[0].mxu0
      %489 = vmatprep.mubr.bf16.mxu0 0
      %490 = vmatmul.mubr.bf16.gmra.mrb[0].mxu0 %v365
      %v491 = vpop.f32.mrb[0].mxu0
      %v492 = vadd.f32 %v334, %v491
      %v493 = vpop.f32.mrb[0].mxu0
      %v494 = vpop.f32.mrb[0].mxu0
      %v495 = vadd.f32 %v334, %v494
      %v496 = vpop.f32.mrb[0].mxu0
      %497 = vmatprep.mubr.bf16.mxu0 0
      %498 = vmatmul.mubr.bf16.gmra.mrb[0].mxu0 %v368
      %v499 = vpop.f32.mrb[0].mxu0
      %v500 = vadd.f32 %v334, %v499
      %v501 = vpop.f32.mrb[0].mxu0
      %v502 = vpop.f32.mrb[0].mxu0
      %v503 = vadd.f32 %v334, %v502
      %v504 = vpop.f32.mrb[0].mxu0
      %505 = vmatprep.mubr.bf16.mxu0 0
      %506 = vmatmul.mubr.bf16.gmra.mrb[0].mxu0 %v371
      %v507 = vpop.f32.mrb[0].mxu0
      %v508 = vadd.f32 %v334, %v507
      %v509 = vpop.f32.mrb[0].mxu0
      %v510 = vpop.f32.mrb[0].mxu0
      %v511 = vadd.f32 %v334, %v510
      %v512 = vpop.f32.mrb[0].mxu0
      %513 = vmatprep.mubr.bf16.mxu0 0
      %514 = vmatmul.mubr.bf16.gmra.mrb[0].mxu0 %v374
      %v515 = vpop.f32.mrb[0].mxu0
      %v516 = vadd.f32 %v334, %v515
      %v517 = vpop.f32.mrb[0].mxu0
      %v518 = vpop.f32.mrb[0].mxu0
      %v519 = vadd.f32 %v334, %v518
      %v520 = vpop.f32.mrb[0].mxu0
      %521 = vmatprep.mubr.bf16.mxu0 0
      %522 = vmatmul.mubr.bf16.gmra.mrb[0].mxu0 %v377
      %v523 = vpop.f32.mrb[0].mxu0
      %v524 = vadd.f32 %v334, %v523
      %v525 = vpop.f32.mrb[0].mxu0
      %v526 = vpop.f32.mrb[0].mxu0
      %v527 = vadd.f32 %v334, %v526
      %v528 = vpop.f32.mrb[0].mxu0
      %529 = vmatprep.mubr.bf16.mxu0 0
      %530 = vmatmul.mubr.bf16.gmra.mrb[0].mxu0 %v380
      %v531 = vpop.f32.mrb[0].mxu0
      %v532 = vadd.f32 %v334, %v531
      %v533 = vpop.f32.mrb[0].mxu0
      %v534 = vpop.f32.mrb[0].mxu0
      %v535 = vadd.f32 %v334, %v534
      %v536 = vpop.f32.mrb[0].mxu0
      %537 = vmatprep.mubr.bf16.mxu0 0
      %538 = vmatmul.mubr.bf16.gmra.mrb[0].mxu0 %v383
      %v539 = vpop.f32.mrb[0].mxu0
      %v540 = vadd.f32 %v334, %v539
      %v541 = vpop.f32.mrb[0].mxu0
      %v542 = vpop.f32.mrb[0].mxu0
      %v543 = vadd.f32 %v334, %v542
      %v544 = vpop.f32.mrb[0].mxu0
      %545 = vdwg.mxu0
      %v546 = vmax.f32 %v420, 0.0
      %v547 = vmax.f32 %v423, 0.0
      %v548 = vmax.f32 %v428, 0.0
      %v549 = vmax.f32 %v431, 0.0
      %v550 = vmax.f32 %v436, 0.0
      %v551 = vmax.f32 %v439, 0.0
      %v552 = vmax.f32 %v444, 0.0
      %v553 = vmax.f32 %v447, 0.0
      %v554 = vmax.f32 %v452, 0.0
      %v555 = vmax.f32 %v455, 0.0
      %v556 = vmax.f32 %v460, 0.0
      %v557 = vmax.f32 %v463, 0.0
      %v558 = vmax.f32 %v468, 0.0
      %v559 = vmax.f32 %v471, 0.0
      %v560 = vmax.f32 %v476, 0.0
      %v561 = vmax.f32 %v479, 0.0
      %v562 = vmax.f32 %v484, 0.0
      %v563 = vmax.f32 %v487, 0.0
      %v564 = vmax.f32 %v492, 0.0
      %v565 = vmax.f32 %v495, 0.0
      %v566 = vmax.f32 %v500, 0.0
      %v567 = vmax.f32 %v503, 0.0
      %v568 = vmax.f32 %v508, 0.0
      %v569 = vmax.f32 %v511, 0.0
      %v570 = vmax.f32 %v516, 0.0
      %v571 = vmax.f32 %v519, 0.0
      %v572 = vmax.f32 %v524, 0.0
      %v573 = vmax.f32 %v527, 0.0
      %v574 = vmax.f32 %v532, 0.0
      %v575 = vmax.f32 %v535, 0.0
      %v576 = vmax.f32 %v540, 0.0
      %v577 = vmax.f32 %v543, 0.0
      %v578 = vld [vmem:[%s269] sm:$0xff]
      %v579 = vld [vmem:[%s269 + $0x8] sm:$0xff]
      %v580 = vld [vmem:[%s269 + $0x10] sm:$0xff]
      %v581 = vld [vmem:[%s269 + $0x18] sm:$0xff]
      %v582 = vld [vmem:[%s269 + $0x20] sm:$0xff]
      %v583 = vld [vmem:[%s269 + $0x28] sm:$0xff]
      %v584 = vld [vmem:[%s269 + $0x30] sm:$0xff]
      %v585 = vld [vmem:[%s269 + $0x38] sm:$0xff]
      %v586 = vld [vmem:[%s269 + $0x40] sm:$0xff]
      %v587 = vld [vmem:[%s269 + $0x48] sm:$0xff]
      %v588 = vld [vmem:[%s269 + $0x50] sm:$0xff]
      %v589 = vld [vmem:[%s269 + $0x58] sm:$0xff]
      %v590 = vld [vmem:[%s269 + $0x60] sm:$0xff]
      %v591 = vld [vmem:[%s269 + $0x68] sm:$0xff]
      %v592 = vld [vmem:[%s269 + $0x70] sm:$0xff]
      %v593 = vld [vmem:[%s269 + $0x78] sm:$0xff]
      %v594 = vld [vmem:[%s269 + $0x80] sm:$0xff]
      %v595 = vld [vmem:[%s269 + $0x88] sm:$0xff]
      %v596 = vld [vmem:[%s269 + $0x90] sm:$0xff]
      %v597 = vld [vmem:[%s269 + $0x98] sm:$0xff]
      %v598 = vld [vmem:[%s269 + $0xa0] sm:$0xff]
      %v599 = vld [vmem:[%s269 + $0xa8] sm:$0xff]
      %v600 = vld [vmem:[%s269 + $0xb0] sm:$0xff]
      %v601 = vld [vmem:[%s269 + $0xb8] sm:$0xff]
      %v602 = vld [vmem:[%s269 + $0xc0] sm:$0xff]
      %v603 = vld [vmem:[%s269 + $0xc8] sm:$0xff]
      %v604 = vld [vmem:[%s269 + $0xd0] sm:$0xff]
      %v605 = vld [vmem:[%s269 + $0xd8] sm:$0xff]
      %v606 = vld [vmem:[%s269 + $0xe0] sm:$0xff]
      %v607 = vld [vmem:[%s269 + $0xe8] sm:$0xff]
      %v608 = vld [vmem:[%s269 + $0xf0] sm:$0xff]
      %v609 = vld [vmem:[%s269 + $0xf8] sm:$0xff]
      %v610 = vmul.f32 %v546, %v578
      %v611 = vmul.f32 %v547, %v579
      %v612 = vmul.f32 %v548, %v580
      %v613 = vmul.f32 %v549, %v581
      %v614 = vmul.f32 %v550, %v582
      %v615 = vmul.f32 %v551, %v583
      %v616 = vmul.f32 %v552, %v584
      %v617 = vmul.f32 %v553, %v585
      %v618 = vmul.f32 %v554, %v586
      %v619 = vmul.f32 %v555, %v587
      %v620 = vmul.f32 %v556, %v588
      %v621 = vmul.f32 %v557, %v589
      %v622 = vmul.f32 %v558, %v590
      %v623 = vmul.f32 %v559, %v591
      %v624 = vmul.f32 %v560, %v592
      %v625 = vmul.f32 %v561, %v593
      %v626 = vmul.f32 %v562, %v594
      %v627 = vmul.f32 %v563, %v595
      %v628 = vmul.f32 %v564, %v596
      %v629 = vmul.f32 %v565, %v597
      %v630 = vmul.f32 %v566, %v598
      %v631 = vmul.f32 %v567, %v599
      %v632 = vmul.f32 %v568, %v600
      %v633 = vmul.f32 %v569, %v601
      %v634 = vmul.f32 %v570, %v602
      %v635 = vmul.f32 %v571, %v603
      %v636 = vmul.f32 %v572, %v604
      %v637 = vmul.f32 %v573, %v605
      %v638 = vmul.f32 %v574, %v606
      %v639 = vmul.f32 %v575, %v607
      %v640 = vmul.f32 %v576, %v608
      %v641 = vmul.f32 %v577, %v609
      %v642 = vpack.c.bf16 %v611, %v610
      %v643 = vpack.c.bf16 %v613, %v612
      %v644 = vpack.c.bf16 %v615, %v614
      %v645 = vpack.c.bf16 %v617, %v616
      %v646 = vpack.c.bf16 %v619, %v618
      %v647 = vpack.c.bf16 %v621, %v620
      %v648 = vpack.c.bf16 %v623, %v622
      %v649 = vpack.c.bf16 %v625, %v624
      %v650 = vpack.c.bf16 %v627, %v626
      %v651 = vpack.c.bf16 %v629, %v628
      %v652 = vpack.c.bf16 %v631, %v630
      %v653 = vpack.c.bf16 %v633, %v632
      %v654 = vpack.c.bf16 %v635, %v634
      %v655 = vpack.c.bf16 %v637, %v636
      %v656 = vpack.c.bf16 %v639, %v638
      %v657 = vpack.c.bf16 %v641, %v640
      %v658 = vld [vmem:[%s4] sm:$0xff]
      %v659 = vld [vmem:[%s4 + $0x8] sm:$0xff]
      %v660 = vld [vmem:[%s4 + $0x10] sm:$0xff]
      %v661 = vld [vmem:[%s4 + $0x18] sm:$0xff]
      %v662 = vpack.c.bf16 %v659, %v658
      %v663 = vpack.c.bf16 %v661, %v660
      %v664 = vld [vmem:[%s5] sm:$0x1]
      %v666 = vlaneseq
      %v667 = vshrl.u32 %v666, 7
      %v668 = vsub.s32 0, %v667
      %v669 = vrot.slane %v664, %v668
      %vm671 = vcmask 261120
      %v673 = vsel %vm671, %v642, 0
      %v676 = vsel %vm671, %v643, 0
      %v679 = vsel %vm671, %v644, 0
      %v682 = vsel %vm671, %v645, 0
      %v685 = vsel %vm671, %v646, 0
      %v688 = vsel %vm671, %v647, 0
      %v691 = vsel %vm671, %v648, 0
      %v694 = vsel %vm671, %v649, 0
      %v697 = vsel %vm671, %v650, 0
      %v700 = vsel %vm671, %v651, 0
      %v703 = vsel %vm671, %v652, 0
      %v706 = vsel %vm671, %v653, 0
      %v709 = vsel %vm671, %v654, 0
      %v712 = vsel %vm671, %v655, 0
      %v715 = vsel %vm671, %v656, 0
      %v718 = vsel %vm671, %v657, 0
      %720 = vmatprep.subr.bf16.mxu0 0
      %721 = vmatpush1.bf16.msra.mxu0 %v662
      %722 = vmatprep.subr.bf16.mxu0 0
      %723 = vmatpush1.bf16.msra.mxu0 %v663
      %724 = vmatprep.subr.bf16.mxu0 0
      %725 = vmatpush1.bf16.msra.mxu0 0
      %726 = vmatprep.subr.bf16.mxu0 0
      %727 = vmatpush1.bf16.msra.mxu0 0
      %728 = vmatprep.subr.bf16.mxu0 0
      %729 = vmatpush1.bf16.msra.mxu0 0
      %730 = vmatprep.subr.bf16.mxu0 0
      %731 = vmatpush1.bf16.msra.mxu0 0
      %732 = vmatprep.subr.bf16.mxu0 0
      %733 = vmatpush1.bf16.msra.mxu0 0
      %734 = vmatprep.subr.bf16.mxu0 0
      %735 = vmatpush1.bf16.msra.mxu0 0
      %736 = vmatprep.subr.bf16.mxu0 0
      %737 = vmatpush1.bf16.msra.mxu0 0
      %738 = vmatprep.subr.bf16.mxu0 0
      %739 = vmatpush1.bf16.msra.mxu0 0
      %740 = vmatprep.subr.bf16.mxu0 0
      %741 = vmatpush1.bf16.msra.mxu0 0
      %742 = vmatprep.subr.bf16.mxu0 0
      %743 = vmatpush1.bf16.msra.mxu0 0
      %744 = vmatprep.subr.bf16.mxu0 0
      %745 = vmatpush1.bf16.msra.mxu0 0
      %746 = vmatprep.subr.bf16.mxu0 0
      %747 = vmatpush1.bf16.msra.mxu0 0
      %748 = vmatprep.subr.bf16.mxu0 0
      %749 = vmatpush1.bf16.msra.mxu0 0
      %750 = vmatprep.subr.bf16.mxu0 0
      %751 = vmatpush1.bf16.msra.mxu0 0
      %752 = vmatprep.mubr.bf16.mxu0 0
      %753 = vmatmul.mubr.bf16.gmra.mrb[0].mxu0 %v673
      %v754 = vpop.f32.mrb[0].mxu0
      %v755 = vadd.f32 %v669, %v754
      %v756 = vpop.f32.mrb[0].mxu0
      %v757 = vpop.f32.mrb[0].mxu0
      %v758 = vadd.f32 %v669, %v757
      %v759 = vpop.f32.mrb[0].mxu0
      %760 = vmatprep.mubr.bf16.mxu0 0
      %761 = vmatmul.mubr.bf16.gmra.mrb[0].mxu0 %v676
      %v762 = vpop.f32.mrb[0].mxu0
      %v763 = vadd.f32 %v669, %v762
      %v764 = vpop.f32.mrb[0].mxu0
      %v765 = vpop.f32.mrb[0].mxu0
      %v766 = vadd.f32 %v669, %v765
      %v767 = vpop.f32.mrb[0].mxu0
      %768 = vmatprep.mubr.bf16.mxu0 0
      %769 = vmatmul.mubr.bf16.gmra.mrb[0].mxu0 %v679
      %v770 = vpop.f32.mrb[0].mxu0
      %v771 = vadd.f32 %v669, %v770
      %v772 = vpop.f32.mrb[0].mxu0
      %v773 = vpop.f32.mrb[0].mxu0
      %v774 = vadd.f32 %v669, %v773
      %v775 = vpop.f32.mrb[0].mxu0
      %776 = vmatprep.mubr.bf16.mxu0 0
      %777 = vmatmul.mubr.bf16.gmra.mrb[0].mxu0 %v682
      %v778 = vpop.f32.mrb[0].mxu0
      %v779 = vadd.f32 %v669, %v778
      %v780 = vpop.f32.mrb[0].mxu0
      %v781 = vpop.f32.mrb[0].mxu0
      %v782 = vadd.f32 %v669, %v781
      %v783 = vpop.f32.mrb[0].mxu0
      %784 = vmatprep.mubr.bf16.mxu0 0
      %785 = vmatmul.mubr.bf16.gmra.mrb[0].mxu0 %v685
      %v786 = vpop.f32.mrb[0].mxu0
      %v787 = vadd.f32 %v669, %v786
      %v788 = vpop.f32.mrb[0].mxu0
      %v789 = vpop.f32.mrb[0].mxu0
      %v790 = vadd.f32 %v669, %v789
      %v791 = vpop.f32.mrb[0].mxu0
      %792 = vmatprep.mubr.bf16.mxu0 0
      %793 = vmatmul.mubr.bf16.gmra.mrb[0].mxu0 %v688
      %v794 = vpop.f32.mrb[0].mxu0
      %v795 = vadd.f32 %v669, %v794
      %v796 = vpop.f32.mrb[0].mxu0
      %v797 = vpop.f32.mrb[0].mxu0
      %v798 = vadd.f32 %v669, %v797
      %v799 = vpop.f32.mrb[0].mxu0
      %800 = vmatprep.mubr.bf16.mxu0 0
      %801 = vmatmul.mubr.bf16.gmra.mrb[0].mxu0 %v691
      %v802 = vpop.f32.mrb[0].mxu0
      %v803 = vadd.f32 %v669, %v802
      %v804 = vpop.f32.mrb[0].mxu0
      %v805 = vpop.f32.mrb[0].mxu0
      %v806 = vadd.f32 %v669, %v805
      %v807 = vpop.f32.mrb[0].mxu0
      %808 = vmatprep.mubr.bf16.mxu0 0
      %809 = vmatmul.mubr.bf16.gmra.mrb[0].mxu0 %v694
      %v810 = vpop.f32.mrb[0].mxu0
      %v811 = vadd.f32 %v669, %v810
      %v812 = vpop.f32.mrb[0].mxu0
      %v813 = vpop.f32.mrb[0].mxu0
      %v814 = vadd.f32 %v669, %v813
      %v815 = vpop.f32.mrb[0].mxu0
      %816 = vmatprep.mubr.bf16.mxu0 0
      %817 = vmatmul.mubr.bf16.gmra.mrb[0].mxu0 %v697
      %v818 = vpop.f32.mrb[0].mxu0
      %v819 = vadd.f32 %v669, %v818
      %v820 = vpop.f32.mrb[0].mxu0
      %v821 = vpop.f32.mrb[0].mxu0
      %v822 = vadd.f32 %v669, %v821
      %v823 = vpop.f32.mrb[0].mxu0
      %824 = vmatprep.mubr.bf16.mxu0 0
      %825 = vmatmul.mubr.bf16.gmra.mrb[0].mxu0 %v700
      %v826 = vpop.f32.mrb[0].mxu0
      %v827 = vadd.f32 %v669, %v826
      %v828 = vpop.f32.mrb[0].mxu0
      %v829 = vpop.f32.mrb[0].mxu0
      %v830 = vadd.f32 %v669, %v829
      %v831 = vpop.f32.mrb[0].mxu0
      %832 = vmatprep.mubr.bf16.mxu0 0
      %833 = vmatmul.mubr.bf16.gmra.mrb[0].mxu0 %v703
      %v834 = vpop.f32.mrb[0].mxu0
      %v835 = vadd.f32 %v669, %v834
      %v836 = vpop.f32.mrb[0].mxu0
      %v837 = vpop.f32.mrb[0].mxu0
      %v838 = vadd.f32 %v669, %v837
      %v839 = vpop.f32.mrb[0].mxu0
      %840 = vmatprep.mubr.bf16.mxu0 0
      %841 = vmatmul.mubr.bf16.gmra.mrb[0].mxu0 %v706
      %v842 = vpop.f32.mrb[0].mxu0
      %v843 = vadd.f32 %v669, %v842
      %v844 = vpop.f32.mrb[0].mxu0
      %v845 = vpop.f32.mrb[0].mxu0
      %v846 = vadd.f32 %v669, %v845
      %v847 = vpop.f32.mrb[0].mxu0
      %848 = vmatprep.mubr.bf16.mxu0 0
      %849 = vmatmul.mubr.bf16.gmra.mrb[0].mxu0 %v709
      %v850 = vpop.f32.mrb[0].mxu0
      %v851 = vadd.f32 %v669, %v850
      %v852 = vpop.f32.mrb[0].mxu0
      %v853 = vpop.f32.mrb[0].mxu0
      %v854 = vadd.f32 %v669, %v853
      %v855 = vpop.f32.mrb[0].mxu0
      %856 = vmatprep.mubr.bf16.mxu0 0
      %857 = vmatmul.mubr.bf16.gmra.mrb[0].mxu0 %v712
      %v858 = vpop.f32.mrb[0].mxu0
      %v859 = vadd.f32 %v669, %v858
      %v860 = vpop.f32.mrb[0].mxu0
      %v861 = vpop.f32.mrb[0].mxu0
      %v862 = vadd.f32 %v669, %v861
      %v863 = vpop.f32.mrb[0].mxu0
      %864 = vmatprep.mubr.bf16.mxu0 0
      %865 = vmatmul.mubr.bf16.gmra.mrb[0].mxu0 %v715
      %v866 = vpop.f32.mrb[0].mxu0
      %v867 = vadd.f32 %v669, %v866
      %v868 = vpop.f32.mrb[0].mxu0
      %v869 = vpop.f32.mrb[0].mxu0
      %v870 = vadd.f32 %v669, %v869
      %v871 = vpop.f32.mrb[0].mxu0
      %872 = vmatprep.mubr.bf16.mxu0 0
      %873 = vmatmul.mubr.bf16.gmra.mrb[0].mxu0 %v718
      %v874 = vpop.f32.mrb[0].mxu0
      %v875 = vadd.f32 %v669, %v874
      %v876 = vpop.f32.mrb[0].mxu0
      %v877 = vpop.f32.mrb[0].mxu0
      %v878 = vadd.f32 %v669, %v877
      %v879 = vpop.f32.mrb[0].mxu0
      %880 = vdwg.mxu0
      %vm881 = vcmask 64512
      %882 = vst.msk [vmem:[%s275] sm:$0xff] %vm881, %v755
      %883 = vst.msk [vmem:[%s275 + $0x8] sm:$0xff] %vm881, %v758
      %884 = vst.msk [vmem:[%s275 + $0x10] sm:$0xff] %vm881, %v763
      %885 = vst.msk [vmem:[%s275 + $0x18] sm:$0xff] %vm881, %v766
      %886 = vst.msk [vmem:[%s275 + $0x20] sm:$0xff] %vm881, %v771
      %887 = vst.msk [vmem:[%s275 + $0x28] sm:$0xff] %vm881, %v774
      %888 = vst.msk [vmem:[%s275 + $0x30] sm:$0xff] %vm881, %v779
      %889 = vst.msk [vmem:[%s275 + $0x38] sm:$0xff] %vm881, %v782
      %890 = vst.msk [vmem:[%s275 + $0x40] sm:$0xff] %vm881, %v787
      %891 = vst.msk [vmem:[%s275 + $0x48] sm:$0xff] %vm881, %v790
      %892 = vst.msk [vmem:[%s275 + $0x50] sm:$0xff] %vm881, %v795
      %893 = vst.msk [vmem:[%s275 + $0x58] sm:$0xff] %vm881, %v798
      %894 = vst.msk [vmem:[%s275 + $0x60] sm:$0xff] %vm881, %v803
      %895 = vst.msk [vmem:[%s275 + $0x68] sm:$0xff] %vm881, %v806
      %896 = vst.msk [vmem:[%s275 + $0x70] sm:$0xff] %vm881, %v811
      %897 = vst.msk [vmem:[%s275 + $0x78] sm:$0xff] %vm881, %v814
      %898 = vst.msk [vmem:[%s275 + $0x80] sm:$0xff] %vm881, %v819
      %899 = vst.msk [vmem:[%s275 + $0x88] sm:$0xff] %vm881, %v822
      %900 = vst.msk [vmem:[%s275 + $0x90] sm:$0xff] %vm881, %v827
      %901 = vst.msk [vmem:[%s275 + $0x98] sm:$0xff] %vm881, %v830
      %902 = vst.msk [vmem:[%s275 + $0xa0] sm:$0xff] %vm881, %v835
      %903 = vst.msk [vmem:[%s275 + $0xa8] sm:$0xff] %vm881, %v838
      %904 = vst.msk [vmem:[%s275 + $0xb0] sm:$0xff] %vm881, %v843
      %905 = vst.msk [vmem:[%s275 + $0xb8] sm:$0xff] %vm881, %v846
      %906 = vst.msk [vmem:[%s275 + $0xc0] sm:$0xff] %vm881, %v851
      %907 = vst.msk [vmem:[%s275 + $0xc8] sm:$0xff] %vm881, %v854
      %908 = vst.msk [vmem:[%s275 + $0xd0] sm:$0xff] %vm881, %v859
      %909 = vst.msk [vmem:[%s275 + $0xd8] sm:$0xff] %vm881, %v862
      %910 = vst.msk [vmem:[%s275 + $0xe0] sm:$0xff] %vm881, %v867
      %911 = vst.msk [vmem:[%s275 + $0xe8] sm:$0xff] %vm881, %v870
      %912 = vst.msk [vmem:[%s275 + $0xf0] sm:$0xff] %vm881, %v875
      %913 = vst.msk [vmem:[%s275 + $0xf8] sm:$0xff] %vm881, %v878
      %s914 = smul.u32 32, %s17
      %p915 = scmp.lt.s32.totalorder %s914, 63
      %s916 = scalar_select %p915, %s914, 63
      %s917 = smul.addr %s916, 8
      %s918 = scalar_lea.vmem %s6, %s917
      // Predicated region
      $region45: #{tpu_custom_call.1} parent=43 // pred_check
        %p919 = pneg %p171
      $region46: #{tpu_custom_call.1} parent=43 // pred_check_branch
        %921 = sbr.rel (%p919) target = $region48
      $region47: #{tpu_custom_call.1} parent=43 // pred_region
        %s922 = smul.u32 32, %s17
      $region48: #{tpu_custom_call.1} parent=43 // pred_fallthru
        _
    $region44: #{tpu_custom_call.1} parent=5 // pred_fallthru
      _
    %p923 = scmp.le.s32.totalorder 2, %s12
    // Predicated region
    $region49: #{tpu_custom_call.1} parent=5 // pred_check
      %p924 = pneg %p923
    $region50: #{tpu_custom_call.1} parent=5 // pred_check_branch
      %926 = sbr.rel (%p924) target = $region52
    $region51: #{tpu_custom_call.1} parent=5 // pred_region
      %s927 = ssub.s32 %s12, 2
      // Predicated region
      $region53: #{tpu_custom_call.1} parent=51 // pred_check
        %p928 = pneg %p177
      $region54: #{tpu_custom_call.1} parent=51 // pred_check_branch
        %930 = sbr.rel (%p928) target = $region56
      $region55: #{tpu_custom_call.1} parent=51 // pred_region
        %s931 = smul.u32 32, %s18
        %p932 = scmp.lt.s32.totalorder %s931, 63
        %s933 = scalar_select %p932, %s931, 63
        %s934 = smul.addr %s933, 8
        %s935 = scalar_lea.vmem %s6, %s934
      $region56: #{tpu_custom_call.1} parent=51 // pred_fallthru
        _
    $region52: #{tpu_custom_call.1} parent=5 // pred_fallthru
      _
  $region6: #{tpu_custom_call.1} parent=0 // loop_footer
    %s16 = sadd.s32 1, %s12
  $region7: #{tpu_custom_call.1} parent=0 // loop_footer_branch
    %11 = sbr.rel target = $region3
  $region8: #{tpu_custom_call.1} parent=0 // loop_exit
    _

</llo_original>
